<compile_context>
chip_gen: v7x
topology: tpu7x:2x2x1
jax: 0.10.0
libtpu: 0.0.40
codegen_flags: <defaults>
</compile_context>

<pallas_src>
import jax
import jax.numpy as jnp
from jax import lax
from jax.experimental import pallas as pl
from jax.experimental.pallas import tpu as pltpu


def _round_up(x, m):
    return ((x + m - 1) // m) * m


def _choose_batch_tile(batch, max_batch_tile):
    """Pick a lane-aligned batch tile.

    Aim for >= ~4 grid steps on large batches (keeps both v7x TensorCores
    busy via the "parallel" grid axis) while never exceeding max_batch_tile
    (VMEM cap) and never going below one 128-lane tile.
    """
    b128 = _round_up(batch, 128)
    target = _round_up(pl.cdiv(batch, 4), 128)
    return max(128, min(max_batch_tile, b128, target))


def _make_mlp_value_kernel(num_layers):
    """Kernel over one batch tile. refs = (x, w1, b1, ..., wL, bL, out).

    x   : [tb, S]            batch-major state tile (straight from HBM)
    w_i : [out_i, in_i]      PyTorch layout, resident in VMEM
    b_i : [out_i, 1]         broadcasts over the batch/lane axis
    out : [1, tb]            lane-dense value row
    """

    def kernel(*refs):
        x_ref = refs[0]
        out_ref = refs[-1]
        x = x_ref[...]                                     # [tb, S]

        w0 = refs[1][...]                                  # [out0, S]
        b0 = refs[2][...]                                  # [out0, 1]
        # Contract the feature axis of both operands (== w0 @ x.T); the MXU
        # handles the transposed RHS, so no wrapper transpose is needed.
        h = lax.dot_general(
            w0, x, (((1,), (1,)), ((), ())),
            preferred_element_type=jnp.float32) + b0       # [out0, tb]
        if num_layers > 1:
            h = jnp.maximum(h, 0.0)                        # ReLU (hidden layer)

        for li in range(1, num_layers):
            w = refs[1 + 2 * li][...]                      # [out_i, in_i]
            b = refs[2 + 2 * li][...]                      # [out_i, 1]
            h = jnp.dot(w, h, preferred_element_type=jnp.float32) + b
            if li < num_layers - 1:
                h = jnp.maximum(h, 0.0)                    # ReLU on hidden only

        out_ref[...] = h                                   # [1, tb]

    return kernel


def fc_value_brain_forward(state, params, *, max_batch_tile=16384):
    """state: [B, state_size] f32.  params: list of (W [out,in], b [out])."""
    B, S = state.shape
    num_layers = len(params)

    tb = _choose_batch_tile(B, max_batch_tile)
    grid_b = pl.cdiv(B, tb)
    b_pad = grid_b * tb

    flat_inputs = [state]
    in_specs = [pl.BlockSpec((tb, S), lambda i: (i, 0))]   # batch-tiled state
    for w, b in params:
        b2 = b.reshape(-1, 1)                              # [out, 1]
        flat_inputs += [w, b2]
        # constant index_map -> weights/biases stay resident across the grid
        in_specs.append(pl.BlockSpec(w.shape, lambda i: (0, 0)))
        in_specs.append(pl.BlockSpec(b2.shape, lambda i: (0, 0)))

    # VMEM budget: double-buffered batch-major state tile is lane-padded
    # (S -> 128 lanes); double-buffered [1, tb] output is sublane-padded
    # (1 -> 8). Weights/biases + compiler scratch get a fixed margin.
    needed = 2 * tb * 128 * 4 + 2 * tb * 8 * 4 + (4 << 20)
    vmem_limit = int(min(100 << 20, max(32 << 20, needed)))

    out = pl.pallas_call(
        _make_mlp_value_kernel(num_layers),
        out_shape=jax.ShapeDtypeStruct((1, b_pad), jnp.float32),
        grid=(grid_b,),
        in_specs=in_specs,
        out_specs=pl.BlockSpec((1, tb), lambda i: (0, i)),  # lane-dense output
        compiler_params=pltpu.CompilerParams(
            # batch axis is embarrassingly parallel -> megacore sharding on v7x
            dimension_semantics=("parallel",),
            vmem_limit_bytes=vmem_limit,
        ),
    )(*flat_inputs)

    # [1, b_pad] -> [B, 1] (strip padded columns; first dim is 1 so
    # reshape == transpose).
    return out[:, :B].reshape(B, 1)


def init_params(key, state_size, hidden_sizes):
    """PyTorch nn.Linear default init: U(-1/sqrt(fan_in), 1/sqrt(fan_in)).
    Weights kept in PyTorch [out, in] layout; biases [out]."""
    sizes = [state_size] + list(hidden_sizes) + [1]
    params = []
    for i in range(len(sizes) - 1):
        fan_in, fan_out = sizes[i], sizes[i + 1]
        bound = 1.0 / jnp.sqrt(jnp.float32(fan_in))
        key, kw, kb = jax.random.split(key, 3)
        w = jax.random.uniform(kw, (fan_out, fan_in), jnp.float32, -bound, bound)
        b = jax.random.uniform(kb, (fan_out,), jnp.float32, -bound, bound)
        params.append((w, b))
    return params


def reference_forward(state, params):
    """Pure-JAX reference of the PyTorch forward."""
    x = state
    for w, b in params[:-1]:
        x = jnp.maximum(x @ w.T + b, 0.0)
    w, b = params[-1]
    return x @ w.T + b


if __name__ == "__main__":
    state_size = 16
    hidden_sizes = [32, 32, 16]
    batch = 8

    key = jax.random.PRNGKey(0)
    key, kx = jax.random.split(key)
    state = jax.random.normal(kx, (batch, state_size), jnp.float32)
    params = init_params(key, state_size, hidden_sizes)

    out = jax.block_until_ready(fc_value_brain_forward(state, params))
    ref = reference_forward(state, params)
    assert out.shape == (batch, 1)
    assert jnp.allclose(out, ref, atol=1e-5, rtol=1e-5)

    # Also exercise the multi-tile grid + ragged (partial last block) path.
    key, kx2 = jax.random.split(key)
    big_state = jax.random.normal(kx2, (2100, state_size), jnp.float32)
    out2 = jax.block_until_ready(fc_value_brain_forward(big_state, params))
    ref2 = reference_forward(big_state, params)
    assert out2.shape == (2100, 1)
    assert jnp.allclose(out2, ref2, atol=1e-5, rtol=1e-5)

    print("KERNEL_OK")
</pallas_src>

<mosaic_0001>
module attributes {stable_mosaic.version = 11 : i64} {
  func.func @kernel(%arg0: i32, %arg1: memref<128x16xf32, #tpu.memory_space<vmem>>, %arg2: memref<32x16xf32, #tpu.memory_space<vmem>>, %arg3: memref<32x1xf32, #tpu.memory_space<vmem>>, %arg4: memref<32x32xf32, #tpu.memory_space<vmem>>, %arg5: memref<32x1xf32, #tpu.memory_space<vmem>>, %arg6: memref<16x32xf32, #tpu.memory_space<vmem>>, %arg7: memref<16x1xf32, #tpu.memory_space<vmem>>, %arg8: memref<1x16xf32, #tpu.memory_space<vmem>>, %arg9: memref<1x1xf32, #tpu.memory_space<vmem>>, %arg10: memref<1x128xf32, #tpu.memory_space<vmem>>) attributes {dimension_semantics = [#tpu.dimension_semantics<parallel>], iteration_bounds = array<i64: 1>, scalar_prefetch = 0 : i64, scratch_operands = 0 : i64, tpu.core_type = #tpu.core_type<tc>, window_params = [{transform_indices = @transform_0, window_bounds = array<i64: 128, 16>}, {pipeline_mode = #tpu.pipeline_mode<synchronous>, transform_indices = @transform_1, window_bounds = array<i64: 32, 16>}, {pipeline_mode = #tpu.pipeline_mode<synchronous>, transform_indices = @transform_2, window_bounds = array<i64: 32, 1>}, {pipeline_mode = #tpu.pipeline_mode<synchronous>, transform_indices = @transform_3, window_bounds = array<i64: 32, 32>}, {pipeline_mode = #tpu.pipeline_mode<synchronous>, transform_indices = @transform_4, window_bounds = array<i64: 32, 1>}, {pipeline_mode = #tpu.pipeline_mode<synchronous>, transform_indices = @transform_5, window_bounds = array<i64: 16, 32>}, {pipeline_mode = #tpu.pipeline_mode<synchronous>, transform_indices = @transform_6, window_bounds = array<i64: 16, 1>}, {pipeline_mode = #tpu.pipeline_mode<synchronous>, transform_indices = @transform_7, window_bounds = array<i64: 1, 16>}, {pipeline_mode = #tpu.pipeline_mode<synchronous>, transform_indices = @transform_8, window_bounds = array<i64: 1, 1>}, {transform_indices = @transform_9, window_bounds = array<i64: 1, 128>}]} {
    %c0 = arith.constant 0 : index
    %c0_0 = arith.constant 0 : index
    %0 = vector.load %arg1[%c0, %c0_0] : memref<128x16xf32, #tpu.memory_space<vmem>>, vector<128x16xf32>
    %c0_1 = arith.constant 0 : index
    %c0_2 = arith.constant 0 : index
    %1 = vector.load %arg2[%c0_1, %c0_2] : memref<32x16xf32, #tpu.memory_space<vmem>>, vector<32x16xf32>
    %c0_3 = arith.constant 0 : index
    %c0_4 = arith.constant 0 : index
    %2 = vector.load %arg3[%c0_3, %c0_4] : memref<32x1xf32, #tpu.memory_space<vmem>>, vector<32x1xf32>
    %cst = arith.constant dense<0.000000e+00> : vector<32x128xf32>
    %3 = tpu.matmul %1, %0, %cst {dimension_numbers = #tpu.dot_dimension_numbers<[1], [1], [0], [0], [0, 0, 1, 0], [], []>} : vector<32x16xf32>, vector<128x16xf32>, vector<32x128xf32> -> vector<32x128xf32>
    %4 = vector.broadcast %2 : vector<32x1xf32> to vector<32x128xf32>
    %5 = arith.addf %3, %4 : vector<32x128xf32>
    %cst_5 = arith.constant 0.000000e+00 : f32
    %6 = vector.broadcast %cst_5 : f32 to vector<32x128xf32>
    %7 = arith.maximumf %5, %6 : vector<32x128xf32>
    %c0_6 = arith.constant 0 : index
    %c0_7 = arith.constant 0 : index
    %8 = vector.load %arg4[%c0_6, %c0_7] : memref<32x32xf32, #tpu.memory_space<vmem>>, vector<32x32xf32>
    %c0_8 = arith.constant 0 : index
    %c0_9 = arith.constant 0 : index
    %9 = vector.load %arg5[%c0_8, %c0_9] : memref<32x1xf32, #tpu.memory_space<vmem>>, vector<32x1xf32>
    %cst_10 = arith.constant dense<0.000000e+00> : vector<32x128xf32>
    %10 = tpu.matmul %8, %7, %cst_10 {dimension_numbers = #tpu.dot_dimension_numbers<[1], [0], [0], [1], [0, 0, 1, 1], [], []>} : vector<32x32xf32>, vector<32x128xf32>, vector<32x128xf32> -> vector<32x128xf32>
    %11 = vector.broadcast %9 : vector<32x1xf32> to vector<32x128xf32>
    %12 = arith.addf %10, %11 : vector<32x128xf32>
    %cst_11 = arith.constant 0.000000e+00 : f32
    %13 = vector.broadcast %cst_11 : f32 to vector<32x128xf32>
    %14 = arith.maximumf %12, %13 : vector<32x128xf32>
    %c0_12 = arith.constant 0 : index
    %c0_13 = arith.constant 0 : index
    %15 = vector.load %arg6[%c0_12, %c0_13] : memref<16x32xf32, #tpu.memory_space<vmem>>, vector<16x32xf32>
    %c0_14 = arith.constant 0 : index
    %c0_15 = arith.constant 0 : index
    %16 = vector.load %arg7[%c0_14, %c0_15] : memref<16x1xf32, #tpu.memory_space<vmem>>, vector<16x1xf32>
    %cst_16 = arith.constant dense<0.000000e+00> : vector<16x128xf32>
    %17 = tpu.matmul %15, %14, %cst_16 {dimension_numbers = #tpu.dot_dimension_numbers<[1], [0], [0], [1], [0, 0, 1, 1], [], []>} : vector<16x32xf32>, vector<32x128xf32>, vector<16x128xf32> -> vector<16x128xf32>
    %18 = vector.broadcast %16 : vector<16x1xf32> to vector<16x128xf32>
    %19 = arith.addf %17, %18 : vector<16x128xf32>
    %cst_17 = arith.constant 0.000000e+00 : f32
    %20 = vector.broadcast %cst_17 : f32 to vector<16x128xf32>
    %21 = arith.maximumf %19, %20 : vector<16x128xf32>
    %c0_18 = arith.constant 0 : index
    %c0_19 = arith.constant 0 : index
    %22 = vector.load %arg8[%c0_18, %c0_19] : memref<1x16xf32, #tpu.memory_space<vmem>>, vector<1x16xf32>
    %c0_20 = arith.constant 0 : index
    %c0_21 = arith.constant 0 : index
    %23 = vector.load %arg9[%c0_20, %c0_21] : memref<1x1xf32, #tpu.memory_space<vmem>>, vector<1x1xf32>
    %cst_22 = arith.constant dense<0.000000e+00> : vector<1x128xf32>
    %24 = tpu.matmul %22, %21, %cst_22 {dimension_numbers = #tpu.dot_dimension_numbers<[1], [0], [0], [1], [0, 0, 1, 1], [], []>} : vector<1x16xf32>, vector<16x128xf32>, vector<1x128xf32> -> vector<1x128xf32>
    %25 = vector.broadcast %23 : vector<1x1xf32> to vector<1x128xf32>
    %26 = arith.addf %24, %25 : vector<1x128xf32>
    %c0_23 = arith.constant 0 : index
    %c0_24 = arith.constant 0 : index
    %27 = vector.load %arg10[%c0_23, %c0_24] : memref<1x128xf32, #tpu.memory_space<vmem>>, vector<1x128xf32>
    tpu.vector_store %arg10[%c0_23, %c0_24], %26 {strides = array<i32>} : memref<1x128xf32, #tpu.memory_space<vmem>>, vector<1x128xf32>,
    return
  }
  func.func @transform_0(%arg0: i32) -> (i32, i32) {
    %c0_i32 = arith.constant 0 : i32
    %c0_i32_0 = arith.constant 0 : i32
    return %arg0, %c0_i32 : i32, i32
  }
  func.func @transform_1(%arg0: i32) -> (i32, i32) {
    %c0_i32 = arith.constant 0 : i32
    %c0_i32_0 = arith.constant 0 : i32
    %c0_i32_1 = arith.constant 0 : i32
    return %c0_i32, %c0_i32_0 : i32, i32
  }
  func.func @transform_2(%arg0: i32) -> (i32, i32) {
    %c0_i32 = arith.constant 0 : i32
    %c0_i32_0 = arith.constant 0 : i32
    %c0_i32_1 = arith.constant 0 : i32
    return %c0_i32, %c0_i32_0 : i32, i32
  }
  func.func @transform_3(%arg0: i32) -> (i32, i32) {
    %c0_i32 = arith.constant 0 : i32
    %c0_i32_0 = arith.constant 0 : i32
    %c0_i32_1 = arith.constant 0 : i32
    return %c0_i32, %c0_i32_0 : i32, i32
  }
  func.func @transform_4(%arg0: i32) -> (i32, i32) {
    %c0_i32 = arith.constant 0 : i32
    %c0_i32_0 = arith.constant 0 : i32
    %c0_i32_1 = arith.constant 0 : i32
    return %c0_i32, %c0_i32_0 : i32, i32
  }
  func.func @transform_5(%arg0: i32) -> (i32, i32) {
    %c0_i32 = arith.constant 0 : i32
    %c0_i32_0 = arith.constant 0 : i32
    %c0_i32_1 = arith.constant 0 : i32
    return %c0_i32, %c0_i32_0 : i32, i32
  }
  func.func @transform_6(%arg0: i32) -> (i32, i32) {
    %c0_i32 = arith.constant 0 : i32
    %c0_i32_0 = arith.constant 0 : i32
    %c0_i32_1 = arith.constant 0 : i32
    return %c0_i32, %c0_i32_0 : i32, i32
  }
  func.func @transform_7(%arg0: i32) -> (i32, i32) {
    %c0_i32 = arith.constant 0 : i32
    %c0_i32_0 = arith.constant 0 : i32
    %c0_i32_1 = arith.constant 0 : i32
    return %c0_i32, %c0_i32_0 : i32, i32
  }
  func.func @transform_8(%arg0: i32) -> (i32, i32) {
    %c0_i32 = arith.constant 0 : i32
    %c0_i32_0 = arith.constant 0 : i32
    %c0_i32_1 = arith.constant 0 : i32
    return %c0_i32, %c0_i32_0 : i32, i32
  }
  func.func @transform_9(%arg0: i32) -> (i32, i32) {
    %c0_i32 = arith.constant 0 : i32
    %c0_i32_0 = arith.constant 0 : i32
    return %c0_i32, %arg0 : i32, i32
  }
}

</mosaic_0001>

<llo_original>
// kernel: tpu_custom_call.1
$region0: #{tpu_custom_call.1}
  #allocation0 [shape = 'u32[]', space=smem, size = 0x4, offset = 0x4, fixed_abs, tag = 'smem constant byte address 0x4 - core index']
  #allocation1 [shape = 'u32[144,128]{1,0:T(1,128)}', space=vmem, size = 0x12000, scoped, tag = 'internal scratch']
  #allocation2 [shape = 'f32[1,1]{1,0:T(1,128)S(1)}', space=vmem, size = 0x200, scoped, tag = 'scoped memory for tpu_custom_call.1']
  %s0 = inlined_call_operand.vmem [shape: f32[8,16], index: 0, kind: input, shape index: {}]
  %s1 = inlined_call_operand.vmem [shape: f32[32,16], index: 1, kind: input, shape index: {}]
  %s2 = inlined_call_operand.vmem [shape: f32[32,1], index: 2, kind: input, shape index: {}]
  %s3 = inlined_call_operand.vmem [shape: f32[32,32], index: 3, kind: input, shape index: {}]
  %s4 = inlined_call_operand.vmem [shape: f32[32,1], index: 4, kind: input, shape index: {}]
  %s5 = inlined_call_operand.vmem [shape: f32[16,32], index: 5, kind: input, shape index: {}]
  %s6 = inlined_call_operand.vmem [shape: f32[16,1], index: 6, kind: input, shape index: {}]
  %s7 = inlined_call_operand.vmem [shape: f32[1,16], index: 7, kind: input, shape index: {}]
  %s8 = inlined_call_operand.<no memory space> [shape: f32[1,1], index: 8, kind: input, shape index: {}]
  %s9 = inlined_call_operand.hbm [shape: f32[1,128], index: 9, kind: output, shape index: {}]
  %s10 = sld [smem:[#allocation0]]
  $region46: #{tpu_custom_call.1} parent=0
    _
  %s12 = ssub.s32 1, %s10
  %s13 = scalar_select 0, %s12, %s10
  %v14 = vstv %s8
  %15 = vst [vmem:[#allocation2] sm:$0x1] %v14
  $region1: #{tpu_custom_call.1} parent=0
    #allocation3 [shape = 'u8[512]{0}', space=vmem, size = 0x400, scoped, tag = 'output window, operand 0, single buffered']
    #allocation4 [shape = 's32[1]{0}', space=sflag, size = 0x4, scoped, tag = 'scoped memory for tpu_custom_call.1']
    %16 = vsyncpa [#allocation4], 0
    // Predicated region
    $region2: #{tpu_custom_call.1} parent=1 // pred_check
      _
    $region3: #{tpu_custom_call.1} parent=1 // pred_check_branch
      %18 = sbr.rel (0) target = $region5
    $region4: #{tpu_custom_call.1} parent=1 // pred_region
      _
    $region5: #{tpu_custom_call.1} parent=1 // pred_fallthru
      _
    // Predicated region
    $region6: #{tpu_custom_call.1} parent=1 // pred_check
      _
    $region7: #{tpu_custom_call.1} parent=1 // pred_check_branch
      %20 = sbr.rel (0) target = $region9
    $region8: #{tpu_custom_call.1} parent=1 // pred_region
      _
    $region9: #{tpu_custom_call.1} parent=1 // pred_fallthru
      _
    // Predicated region
    $region10: #{tpu_custom_call.1} parent=1 // pred_check
      _
    $region11: #{tpu_custom_call.1} parent=1 // pred_check_branch
      %22 = sbr.rel (0) target = $region13
    $region12: #{tpu_custom_call.1} parent=1 // pred_region
      _
    $region13: #{tpu_custom_call.1} parent=1 // pred_fallthru
      _
    // Predicated region
    $region14: #{tpu_custom_call.1} parent=1 // pred_check
      _
    $region15: #{tpu_custom_call.1} parent=1 // pred_check_branch
      %24 = sbr.rel (0) target = $region17
    $region16: #{tpu_custom_call.1} parent=1 // pred_region
      _
    $region17: #{tpu_custom_call.1} parent=1 // pred_fallthru
      _
    // Predicated region
    $region18: #{tpu_custom_call.1} parent=1 // pred_check
      _
    $region19: #{tpu_custom_call.1} parent=1 // pred_check_branch
      %26 = sbr.rel (0) target = $region21
    $region20: #{tpu_custom_call.1} parent=1 // pred_region
      _
    $region21: #{tpu_custom_call.1} parent=1 // pred_fallthru
      _
    // Predicated region
    $region22: #{tpu_custom_call.1} parent=1 // pred_check
      _
    $region23: #{tpu_custom_call.1} parent=1 // pred_check_branch
      %28 = sbr.rel (0) target = $region25
    $region24: #{tpu_custom_call.1} parent=1 // pred_region
      _
    $region25: #{tpu_custom_call.1} parent=1 // pred_fallthru
      _
    // Predicated region
    $region26: #{tpu_custom_call.1} parent=1 // pred_check
      _
    $region27: #{tpu_custom_call.1} parent=1 // pred_check_branch
      %30 = sbr.rel (0) target = $region29
    $region28: #{tpu_custom_call.1} parent=1 // pred_region
      _
    $region29: #{tpu_custom_call.1} parent=1 // pred_fallthru
      _
    // Predicated region
    $region30: #{tpu_custom_call.1} parent=1 // pred_check
      _
    $region31: #{tpu_custom_call.1} parent=1 // pred_check_branch
      %32 = sbr.rel (0) target = $region33
    $region32: #{tpu_custom_call.1} parent=1 // pred_region
      _
    $region33: #{tpu_custom_call.1} parent=1 // pred_fallthru
      _
    // Predicated region
    $region34: #{tpu_custom_call.1} parent=1 // pred_check
      _
    $region35: #{tpu_custom_call.1} parent=1 // pred_check_branch
      %34 = sbr.rel (0) target = $region37
    $region36: #{tpu_custom_call.1} parent=1 // pred_region
      _
    $region37: #{tpu_custom_call.1} parent=1 // pred_fallthru
      _
    %v35 = vld [vmem:[%s0] sm:$0xff]
    %v36 = vld [vmem:[%s0 + $0x8] sm:$0xff]
    %v37 = vld [vmem:[%s0 + $0x10] sm:$0xff]
    %v38 = vld [vmem:[%s0 + $0x18] sm:$0xff]
    %v39 = vld [vmem:[%s0 + $0x20] sm:$0xff]
    %v40 = vld [vmem:[%s0 + $0x28] sm:$0xff]
    %v41 = vld [vmem:[%s0 + $0x30] sm:$0xff]
    %v42 = vld [vmem:[%s0 + $0x38] sm:$0xff]
    %v43 = vld [vmem:[%s0 + $0x40] sm:$0xff]
    %v44 = vld [vmem:[%s0 + $0x48] sm:$0xff]
    %v45 = vld [vmem:[%s0 + $0x50] sm:$0xff]
    %v46 = vld [vmem:[%s0 + $0x58] sm:$0xff]
    %v47 = vld [vmem:[%s0 + $0x60] sm:$0xff]
    %v48 = vld [vmem:[%s0 + $0x68] sm:$0xff]
    %v49 = vld [vmem:[%s0 + $0x70] sm:$0xff]
    %v50 = vld [vmem:[%s0 + $0x78] sm:$0xff]
    %v51 = vld [vmem:[%s1] sm:$0xff]
    %v52 = vld [vmem:[%s1 + $0x8] sm:$0xff]
    %v53 = vld [vmem:[%s1 + $0x10] sm:$0xff]
    %v54 = vld [vmem:[%s1 + $0x18] sm:$0xff]
    %v55 = vld [vmem:[%s2] sm:$0xff]
    %v56 = vld [vmem:[%s2 + $0x8] sm:$0xff]
    %v57 = vld [vmem:[%s2 + $0x10] sm:$0xff]
    %v58 = vld [vmem:[%s2 + $0x18] sm:$0xff]
    %60 = vset.pattern.permute.xlu0 0
    %61 = vperm.xlu0 %60, %v55
    %v62 = vpop.permute.xlu0 %61
    %65 = vset.pattern.permute.xlu0 0
    %66 = vperm.xlu0 %65, %v56
    %v67 = vpop.permute.xlu0 %66
    %70 = vset.pattern.permute.xlu0 0
    %71 = vperm.xlu0 %70, %v57
    %v72 = vpop.permute.xlu0 %71
    %75 = vset.pattern.permute.xlu0 0
    %76 = vperm.xlu0 %75, %v58
    %v77 = vpop.permute.xlu0 %76
    %vm79 = vcmask 130048
    %v81 = vsel %vm79, %v51, 0
    %v84 = vsel %vm79, %v52, 0
    %v87 = vsel %vm79, %v53, 0
    %v90 = vsel %vm79, %v54, 0
    %v93 = vsel %vm79, %v35, 0
    %v96 = vsel %vm79, %v36, 0
    %v99 = vsel %vm79, %v37, 0
    %v102 = vsel %vm79, %v38, 0
    %v105 = vsel %vm79, %v39, 0
    %v108 = vsel %vm79, %v40, 0
    %v111 = vsel %vm79, %v41, 0
    %v114 = vsel %vm79, %v42, 0
    %v117 = vsel %vm79, %v43, 0
    %v120 = vsel %vm79, %v44, 0
    %v123 = vsel %vm79, %v45, 0
    %v126 = vsel %vm79, %v46, 0
    %v129 = vsel %vm79, %v47, 0
    %v132 = vsel %vm79, %v48, 0
    %v135 = vsel %vm79, %v49, 0
    %v138 = vsel %vm79, %v50, 0
    %140 = vmatprep.subr.mxu0 0.0
    %141 = vmatpush1.xpose.msra.mxu0 %v93
    %142 = vmatprep.subr.mxu0 0.0
    %143 = vmatpush1.xpose.msra.mxu0 %v96
    %144 = vmatprep.subr.mxu0 0.0
    %145 = vmatpush1.xpose.msra.mxu0 %v99
    %146 = vmatprep.subr.mxu0 0.0
    %147 = vmatpush1.xpose.msra.mxu0 %v102
    %148 = vmatprep.subr.mxu0 0.0
    %149 = vmatpush1.xpose.msra.mxu0 %v105
    %150 = vmatprep.subr.mxu0 0.0
    %151 = vmatpush1.xpose.msra.mxu0 %v108
    %152 = vmatprep.subr.mxu0 0.0
    %153 = vmatpush1.xpose.msra.mxu0 %v111
    %154 = vmatprep.subr.mxu0 0.0
    %155 = vmatpush1.xpose.msra.mxu0 %v114
    %156 = vmatprep.subr.mxu0 0.0
    %157 = vmatpush1.xpose.msra.mxu0 %v117
    %158 = vmatprep.subr.mxu0 0.0
    %159 = vmatpush1.xpose.msra.mxu0 %v120
    %160 = vmatprep.subr.mxu0 0.0
    %161 = vmatpush1.xpose.msra.mxu0 %v123
    %162 = vmatprep.subr.mxu0 0.0
    %163 = vmatpush1.xpose.msra.mxu0 %v126
    %164 = vmatprep.subr.mxu0 0.0
    %165 = vmatpush1.xpose.msra.mxu0 %v129
    %166 = vmatprep.subr.mxu0 0.0
    %167 = vmatpush1.xpose.msra.mxu0 %v132
    %168 = vmatprep.subr.mxu0 0.0
    %169 = vmatpush1.xpose.msra.mxu0 %v135
    %170 = vmatprep.subr.mxu0 0.0
    %171 = vmatpush1.xpose.msra.mxu0 %v138
    %172 = vmatprep.subr.mxu0 0.0
    %173 = vmatpush1.xpose.msra.mxu0 0.0
    %174 = vmatprep.subr.mxu0 0.0
    %175 = vmatpush1.xpose.msra.mxu0 0.0
    %176 = vmatprep.subr.mxu0 0.0
    %177 = vmatpush1.xpose.msra.mxu0 0.0
    %178 = vmatprep.subr.mxu0 0.0
    %179 = vmatpush1.xpose.msra.mxu0 0.0
    %180 = vmatprep.subr.mxu0 0.0
    %181 = vmatpush1.xpose.msra.mxu0 0.0
    %182 = vmatprep.subr.mxu0 0.0
    %183 = vmatpush1.xpose.msra.mxu0 0.0
    %184 = vmatprep.subr.mxu0 0.0
    %185 = vmatpush1.xpose.msra.mxu0 0.0
    %186 = vmatprep.subr.mxu0 0.0
    %187 = vmatpush1.xpose.msra.mxu0 0.0
    %188 = vmatprep.subr.mxu0 0.0
    %189 = vmatpush1.xpose.msra.mxu0 0.0
    %190 = vmatprep.subr.mxu0 0.0
    %191 = vmatpush1.xpose.msra.mxu0 0.0
    %192 = vmatprep.subr.mxu0 0.0
    %193 = vmatpush1.xpose.msra.mxu0 0.0
    %194 = vmatprep.subr.mxu0 0.0
    %195 = vmatpush1.xpose.msra.mxu0 0.0
    %196 = vmatprep.subr.mxu0 0.0
    %197 = vmatpush1.xpose.msra.mxu0 0.0
    %198 = vmatprep.subr.mxu0 0.0
    %199 = vmatpush1.xpose.msra.mxu0 0.0
    %200 = vmatprep.subr.mxu0 0.0
    %201 = vmatpush1.xpose.msra.mxu0 0.0
    %202 = vmatprep.subr.mxu0 0.0
    %203 = vmatpush1.xpose.msra.mxu0 0.0
    %204 = vmatprep.mubr.f32.mxu0 0.0
    %205 = vmatmul.mubr.f32.gmra.mrb[0].mxu0 %v81
    %v206 = vpop.f32.mrb[0].mxu0
    %v207 = vadd.f32 %v62, %v206
    %v208 = vpop.f32.mrb[0].mxu0
    %209 = vmatprep.mubr.f32.mxu0 0.0
    %210 = vmatmul.mubr.f32.gmra.mrb[0].mxu0 %v84
    %v211 = vpop.f32.mrb[0].mxu0
    %v212 = vadd.f32 %v67, %v211
    %v213 = vpop.f32.mrb[0].mxu0
    %214 = vmatprep.mubr.f32.mxu0 0.0
    %215 = vmatmul.mubr.f32.gmra.mrb[0].mxu0 %v87
    %v216 = vpop.f32.mrb[0].mxu0
    %v217 = vadd.f32 %v72, %v216
    %v218 = vpop.f32.mrb[0].mxu0
    %219 = vmatprep.mubr.f32.mxu0 0.0
    %220 = vmatmul.mubr.f32.gmra.mrb[0].mxu0 %v90
    %v221 = vpop.f32.mrb[0].mxu0
    %v222 = vadd.f32 %v77, %v221
    %v223 = vpop.f32.mrb[0].mxu0
    %224 = vdwg.mxu0
    %v225 = vmax.f32 %v207, 0.0
    %v226 = vmax.f32 %v212, 0.0
    %v227 = vmax.f32 %v217, 0.0
    %v228 = vmax.f32 %v222, 0.0
    %v229 = vld [vmem:[%s3] sm:$0xff]
    %v230 = vld [vmem:[%s3 + $0x8] sm:$0xff]
    %v231 = vld [vmem:[%s3 + $0x10] sm:$0xff]
    %v232 = vld [vmem:[%s3 + $0x18] sm:$0xff]
    %v233 = vld [vmem:[%s4] sm:$0xff]
    %v234 = vld [vmem:[%s4 + $0x8] sm:$0xff]
    %v235 = vld [vmem:[%s4 + $0x10] sm:$0xff]
    %v236 = vld [vmem:[%s4 + $0x18] sm:$0xff]
    %238 = vset.pattern.permute.xlu0 0
    %239 = vperm.xlu0 %238, %v233
    %v240 = vpop.permute.xlu0 %239
    %243 = vset.pattern.permute.xlu0 0
    %244 = vperm.xlu0 %243, %v234
    %v245 = vpop.permute.xlu0 %244
    %248 = vset.pattern.permute.xlu0 0
    %249 = vperm.xlu0 %248, %v235
    %v250 = vpop.permute.xlu0 %249
    %253 = vset.pattern.permute.xlu0 0
    %254 = vperm.xlu0 %253, %v236
    %v255 = vpop.permute.xlu0 %254
    %vm257 = vcmask 261120
    %v259 = vsel %vm257, %v229, 0
    %v262 = vsel %vm257, %v230, 0
    %v265 = vsel %vm257, %v231, 0
    %v268 = vsel %vm257, %v232, 0
    %270 = vmatprep.subr.mxu0 0.0
    %271 = vmatpush1.msra.mxu0 %v225
    %272 = vmatprep.subr.mxu0 0.0
    %273 = vmatpush1.msra.mxu0 %v226
    %274 = vmatprep.subr.mxu0 0.0
    %275 = vmatpush1.msra.mxu0 %v227
    %276 = vmatprep.subr.mxu0 0.0
    %277 = vmatpush1.msra.mxu0 %v228
    %278 = vmatprep.subr.mxu0 0.0
    %279 = vmatpush1.msra.mxu0 0.0
    %280 = vmatprep.subr.mxu0 0.0
    %281 = vmatpush1.msra.mxu0 0.0
    %282 = vmatprep.subr.mxu0 0.0
    %283 = vmatpush1.msra.mxu0 0.0
    %284 = vmatprep.subr.mxu0 0.0
    %285 = vmatpush1.msra.mxu0 0.0
    %286 = vmatprep.subr.mxu0 0.0
    %287 = vmatpush1.msra.mxu0 0.0
    %288 = vmatprep.subr.mxu0 0.0
    %289 = vmatpush1.msra.mxu0 0.0
    %290 = vmatprep.subr.mxu0 0.0
    %291 = vmatpush1.msra.mxu0 0.0
    %292 = vmatprep.subr.mxu0 0.0
    %293 = vmatpush1.msra.mxu0 0.0
    %294 = vmatprep.subr.mxu0 0.0
    %295 = vmatpush1.msra.mxu0 0.0
    %296 = vmatprep.subr.mxu0 0.0
    %297 = vmatpush1.msra.mxu0 0.0
    %298 = vmatprep.subr.mxu0 0.0
    %299 = vmatpush1.msra.mxu0 0.0
    %300 = vmatprep.subr.mxu0 0.0
    %301 = vmatpush1.msra.mxu0 0.0
    %302 = vmatprep.subr.mxu0 0.0
    %303 = vmatpush1.msra.mxu0 0.0
    %304 = vmatprep.subr.mxu0 0.0
    %305 = vmatpush1.msra.mxu0 0.0
    %306 = vmatprep.subr.mxu0 0.0
    %307 = vmatpush1.msra.mxu0 0.0
    %308 = vmatprep.subr.mxu0 0.0
    %309 = vmatpush1.msra.mxu0 0.0
    %310 = vmatprep.subr.mxu0 0.0
    %311 = vmatpush1.msra.mxu0 0.0
    %312 = vmatprep.subr.mxu0 0.0
    %313 = vmatpush1.msra.mxu0 0.0
    %314 = vmatprep.subr.mxu0 0.0
    %315 = vmatpush1.msra.mxu0 0.0
    %316 = vmatprep.subr.mxu0 0.0
    %317 = vmatpush1.msra.mxu0 0.0
    %318 = vmatprep.subr.mxu0 0.0
    %319 = vmatpush1.msra.mxu0 0.0
    %320 = vmatprep.subr.mxu0 0.0
    %321 = vmatpush1.msra.mxu0 0.0
    %322 = vmatprep.subr.mxu0 0.0
    %323 = vmatpush1.msra.mxu0 0.0
    %324 = vmatprep.subr.mxu0 0.0
    %325 = vmatpush1.msra.mxu0 0.0
    %326 = vmatprep.subr.mxu0 0.0
    %327 = vmatpush1.msra.mxu0 0.0
    %328 = vmatprep.subr.mxu0 0.0
    %329 = vmatpush1.msra.mxu0 0.0
    %330 = vmatprep.subr.mxu0 0.0
    %331 = vmatpush1.msra.mxu0 0.0
    %332 = vmatprep.subr.mxu0 0.0
    %333 = vmatpush1.msra.mxu0 0.0
    %334 = vmatprep.mubr.f32.mxu0 0.0
    %335 = vmatmul.mubr.f32.gmra.mrb[0].mxu0 %v259
    %v336 = vpop.f32.mrb[0].mxu0
    %v337 = vadd.f32 %v240, %v336
    %v338 = vpop.f32.mrb[0].mxu0
    %339 = vmatprep.mubr.f32.mxu0 0.0
    %340 = vmatmul.mubr.f32.gmra.mrb[0].mxu0 %v262
    %v341 = vpop.f32.mrb[0].mxu0
    %v342 = vadd.f32 %v245, %v341
    %v343 = vpop.f32.mrb[0].mxu0
    %344 = vmatprep.mubr.f32.mxu0 0.0
    %345 = vmatmul.mubr.f32.gmra.mrb[0].mxu0 %v265
    %v346 = vpop.f32.mrb[0].mxu0
    %v347 = vadd.f32 %v250, %v346
    %v348 = vpop.f32.mrb[0].mxu0
    %349 = vmatprep.mubr.f32.mxu0 0.0
    %350 = vmatmul.mubr.f32.gmra.mrb[0].mxu0 %v268
    %v351 = vpop.f32.mrb[0].mxu0
    %v352 = vadd.f32 %v255, %v351
    %v353 = vpop.f32.mrb[0].mxu0
    %354 = vdwg.mxu0
    %v355 = vmax.f32 %v337, 0.0
    %v356 = vmax.f32 %v342, 0.0
    %v357 = vmax.f32 %v347, 0.0
    %v358 = vmax.f32 %v352, 0.0
    %v359 = vld [vmem:[%s5] sm:$0xff]
    %v360 = vld [vmem:[%s5 + $0x8] sm:$0xff]
    %v361 = vld [vmem:[%s6] sm:$0xff]
    %v362 = vld [vmem:[%s6 + $0x8] sm:$0xff]
    %364 = vset.pattern.permute.xlu0 0
    %365 = vperm.xlu0 %364, %v361
    %v366 = vpop.permute.xlu0 %365
    %369 = vset.pattern.permute.xlu0 0
    %370 = vperm.xlu0 %369, %v362
    %v371 = vpop.permute.xlu0 %370
    %v374 = vsel %vm257, %v359, 0
    %v377 = vsel %vm257, %v360, 0
    %379 = vmatprep.subr.mxu0 0.0
    %380 = vmatpush1.msra.mxu0 %v355
    %381 = vmatprep.subr.mxu0 0.0
    %382 = vmatpush1.msra.mxu0 %v356
    %383 = vmatprep.subr.mxu0 0.0
    %384 = vmatpush1.msra.mxu0 %v357
    %385 = vmatprep.subr.mxu0 0.0
    %386 = vmatpush1.msra.mxu0 %v358
    %387 = vmatprep.subr.mxu0 0.0
    %388 = vmatpush1.msra.mxu0 0.0
    %389 = vmatprep.subr.mxu0 0.0
    %390 = vmatpush1.msra.mxu0 0.0
    %391 = vmatprep.subr.mxu0 0.0
    %392 = vmatpush1.msra.mxu0 0.0
    %393 = vmatprep.subr.mxu0 0.0
    %394 = vmatpush1.msra.mxu0 0.0
    %395 = vmatprep.subr.mxu0 0.0
    %396 = vmatpush1.msra.mxu0 0.0
    %397 = vmatprep.subr.mxu0 0.0
    %398 = vmatpush1.msra.mxu0 0.0
    %399 = vmatprep.subr.mxu0 0.0
    %400 = vmatpush1.msra.mxu0 0.0
    %401 = vmatprep.subr.mxu0 0.0
    %402 = vmatpush1.msra.mxu0 0.0
    %403 = vmatprep.subr.mxu0 0.0
    %404 = vmatpush1.msra.mxu0 0.0
    %405 = vmatprep.subr.mxu0 0.0
    %406 = vmatpush1.msra.mxu0 0.0
    %407 = vmatprep.subr.mxu0 0.0
    %408 = vmatpush1.msra.mxu0 0.0
    %409 = vmatprep.subr.mxu0 0.0
    %410 = vmatpush1.msra.mxu0 0.0
    %411 = vmatprep.subr.mxu0 0.0
    %412 = vmatpush1.msra.mxu0 0.0
    %413 = vmatprep.subr.mxu0 0.0
    %414 = vmatpush1.msra.mxu0 0.0
    %415 = vmatprep.subr.mxu0 0.0
    %416 = vmatpush1.msra.mxu0 0.0
    %417 = vmatprep.subr.mxu0 0.0
    %418 = vmatpush1.msra.mxu0 0.0
    %419 = vmatprep.subr.mxu0 0.0
    %420 = vmatpush1.msra.mxu0 0.0
    %421 = vmatprep.subr.mxu0 0.0
    %422 = vmatpush1.msra.mxu0 0.0
    %423 = vmatprep.subr.mxu0 0.0
    %424 = vmatpush1.msra.mxu0 0.0
    %425 = vmatprep.subr.mxu0 0.0
    %426 = vmatpush1.msra.mxu0 0.0
    %427 = vmatprep.subr.mxu0 0.0
    %428 = vmatpush1.msra.mxu0 0.0
    %429 = vmatprep.subr.mxu0 0.0
    %430 = vmatpush1.msra.mxu0 0.0
    %431 = vmatprep.subr.mxu0 0.0
    %432 = vmatpush1.msra.mxu0 0.0
    %433 = vmatprep.subr.mxu0 0.0
    %434 = vmatpush1.msra.mxu0 0.0
    %435 = vmatprep.subr.mxu0 0.0
    %436 = vmatpush1.msra.mxu0 0.0
    %437 = vmatprep.subr.mxu0 0.0
    %438 = vmatpush1.msra.mxu0 0.0
    %439 = vmatprep.subr.mxu0 0.0
    %440 = vmatpush1.msra.mxu0 0.0
    %441 = vmatprep.subr.mxu0 0.0
    %442 = vmatpush1.msra.mxu0 0.0
    %443 = vmatprep.mubr.f32.mxu0 0.0
    %444 = vmatmul.mubr.f32.gmra.mrb[0].mxu0 %v374
    %v445 = vpop.f32.mrb[0].mxu0
    %v446 = vadd.f32 %v366, %v445
    %v447 = vpop.f32.mrb[0].mxu0
    %448 = vmatprep.mubr.f32.mxu0 0.0
    %449 = vmatmul.mubr.f32.gmra.mrb[0].mxu0 %v377
    %v450 = vpop.f32.mrb[0].mxu0
    %v451 = vadd.f32 %v371, %v450
    %v452 = vpop.f32.mrb[0].mxu0
    %453 = vdwg.mxu0
    %v454 = vmax.f32 %v446, 0.0
    %v455 = vmax.f32 %v451, 0.0
    %v456 = vld [vmem:[%s7] sm:$0x1]
    %v457 = vld [vmem:[#allocation2] sm:$0x1]
    %459 = vset.pattern.permute.xlu0 0
    %460 = vperm.xlu0 %459, %v457
    %v461 = vpop.permute.xlu0 %460
    %v463 = vlaneseq
    %v464 = vshrl.u32 %v463, 7
    %v465 = vsub.s32 0, %v464
    %v466 = vrot.slane %v461, %v465
    %v468 = vsel %vm79, %v456, 0
    %470 = vmatprep.subr.mxu0 0.0
    %471 = vmatpush1.msra.mxu0 %v454
    %472 = vmatprep.subr.mxu0 0.0
    %473 = vmatpush1.msra.mxu0 %v455
    %474 = vmatprep.subr.mxu0 0.0
    %475 = vmatpush1.msra.mxu0 0.0
    %476 = vmatprep.subr.mxu0 0.0
    %477 = vmatpush1.msra.mxu0 0.0
    %478 = vmatprep.subr.mxu0 0.0
    %479 = vmatpush1.msra.mxu0 0.0
    %480 = vmatprep.subr.mxu0 0.0
    %481 = vmatpush1.msra.mxu0 0.0
    %482 = vmatprep.subr.mxu0 0.0
    %483 = vmatpush1.msra.mxu0 0.0
    %484 = vmatprep.subr.mxu0 0.0
    %485 = vmatpush1.msra.mxu0 0.0
    %486 = vmatprep.subr.mxu0 0.0
    %487 = vmatpush1.msra.mxu0 0.0
    %488 = vmatprep.subr.mxu0 0.0
    %489 = vmatpush1.msra.mxu0 0.0
    %490 = vmatprep.subr.mxu0 0.0
    %491 = vmatpush1.msra.mxu0 0.0
    %492 = vmatprep.subr.mxu0 0.0
    %493 = vmatpush1.msra.mxu0 0.0
    %494 = vmatprep.subr.mxu0 0.0
    %495 = vmatpush1.msra.mxu0 0.0
    %496 = vmatprep.subr.mxu0 0.0
    %497 = vmatpush1.msra.mxu0 0.0
    %498 = vmatprep.subr.mxu0 0.0
    %499 = vmatpush1.msra.mxu0 0.0
    %500 = vmatprep.subr.mxu0 0.0
    %501 = vmatpush1.msra.mxu0 0.0
    %502 = vmatprep.subr.mxu0 0.0
    %503 = vmatpush1.msra.mxu0 0.0
    %504 = vmatprep.subr.mxu0 0.0
    %505 = vmatpush1.msra.mxu0 0.0
    %506 = vmatprep.subr.mxu0 0.0
    %507 = vmatpush1.msra.mxu0 0.0
    %508 = vmatprep.subr.mxu0 0.0
    %509 = vmatpush1.msra.mxu0 0.0
    %510 = vmatprep.subr.mxu0 0.0
    %511 = vmatpush1.msra.mxu0 0.0
    %512 = vmatprep.subr.mxu0 0.0
    %513 = vmatpush1.msra.mxu0 0.0
    %514 = vmatprep.subr.mxu0 0.0
    %515 = vmatpush1.msra.mxu0 0.0
    %516 = vmatprep.subr.mxu0 0.0
    %517 = vmatpush1.msra.mxu0 0.0
    %518 = vmatprep.subr.mxu0 0.0
    %519 = vmatpush1.msra.mxu0 0.0
    %520 = vmatprep.subr.mxu0 0.0
    %521 = vmatpush1.msra.mxu0 0.0
    %522 = vmatprep.subr.mxu0 0.0
    %523 = vmatpush1.msra.mxu0 0.0
    %524 = vmatprep.subr.mxu0 0.0
    %525 = vmatpush1.msra.mxu0 0.0
    %526 = vmatprep.subr.mxu0 0.0
    %527 = vmatpush1.msra.mxu0 0.0
    %528 = vmatprep.subr.mxu0 0.0
    %529 = vmatpush1.msra.mxu0 0.0
    %530 = vmatprep.subr.mxu0 0.0
    %531 = vmatpush1.msra.mxu0 0.0
    %532 = vmatprep.subr.mxu0 0.0
    %533 = vmatpush1.msra.mxu0 0.0
    %534 = vmatprep.mubr.f32.mxu0 0.0
    %535 = vmatmul.mubr.f32.gmra.mrb[0].mxu0 %v468
    %v536 = vpop.f32.mrb[0].mxu0
    %v537 = vadd.f32 %v466, %v536
    %v538 = vpop.f32.mrb[0].mxu0
    %539 = vdwg.mxu0
    %540 = vst [vmem:[#allocation3] sm:$0x1] %v537
    // Predicated region
    $region38: #{tpu_custom_call.1} parent=1 // pred_check
      _
    $region39: #{tpu_custom_call.1} parent=1 // pred_check_branch
      %542 = sbr.rel (0) target = $region41
    $region40: #{tpu_custom_call.1} parent=1 // pred_region
      %s544 = ssub.s32 16, 16
      %545 = vsyncadd [#allocation4], %s544
      %s547 = sshll.u32 [#allocation3], 4
      %s548 = int_to_ptr.vmem [resolvable:$true] %s547
      %550 = dma.vmem_to_hbm [thread:$0]  %s548, 16, %s9, [#allocation4]
    $region41: #{tpu_custom_call.1} parent=1 // pred_fallthru
      _
    // Predicated region
    $region42: #{tpu_custom_call.1} parent=1 // pred_check
      _
    $region43: #{tpu_custom_call.1} parent=1 // pred_check_branch
      %552 = sbr.rel (0) target = $region45
    $region44: #{tpu_custom_call.1} parent=1 // pred_region
      %553 = dma.done [#allocation4], 16
    $region45: #{tpu_custom_call.1} parent=1 // pred_fallthru
      _
    %554 = vsyncpa [#allocation4], 1

</llo_original>
